<compile_context>
chip_gen: v5e
topology: v5e:2x2
jax: 0.10.0
libtpu: 0.0.40
codegen_flags: <defaults>
</compile_context>

<pallas_src>
import numpy as np
import jax
import jax.numpy as jnp
from jax.experimental import pallas as pl
from jax.experimental.pallas import tpu as pltpu

TM = 128   # node-row tile
TK = 128   # node-column (reduction) tile


# ---------------- Pass 1: node embedding  h = x @ W_emb (bias-free Linear) ----
def embed_kernel(x_ref, w_ref, h_f32_ref, h_bf16_ref):
    h = jnp.dot(x_ref[...], w_ref[...], preferred_element_type=jnp.float32)
    h_f32_ref[...] = h                      # f32 copy: residual / concat half
    h_bf16_ref[...] = h.astype(jnp.bfloat16)  # bf16 copy: streamed A @ h operand


# ---------------- Pass 2: SAGE conv + L2-normalize + BN partial stats ---------
def sage_kernel(adj_ref, hcol_ref, hrow_ref, invdeg_ref, w_sage_ref, b_ref,
                lin_ref, stats_ref, acc_ref):
    k = pl.program_id(1)

    @pl.when(k == 0)
    def _():
        acc_ref[...] = jnp.zeros_like(acc_ref)

    # mean aggregation numerator: binary adjacency tile @ h tile (bf16 MXU, f32 acc)
    acc_ref[...] += jnp.dot(adj_ref[...], hcol_ref[...],
                            preferred_element_type=jnp.float32)

    @pl.when(k == pl.num_programs(1) - 1)
    def _():
        aggr = acc_ref[...] * invdeg_ref[...]            # exact f32 1/deg scale
        h_rows = hrow_ref[...]
        # fused SAGE linear: concat([x, aggr], -1) @ [Wx; Wa]  (single K=2H pass)
        cat = jnp.concatenate([h_rows, aggr], axis=-1).astype(jnp.bfloat16)
        lin = jnp.dot(cat, w_sage_ref[...], preferred_element_type=jnp.float32)
        lin = lin + b_ref[...]
        # F.normalize(p=2, dim=-1); clamp on squared norm preserves 1e-12 semantics
        sumsq = jnp.sum(lin * lin, axis=-1, keepdims=True)
        lin_n = lin * jax.lax.rsqrt(jnp.maximum(sumsq, 1e-24))
        lin_ref[...] = lin_n
        # per-tile BatchNorm partials (sum, sum-of-squares) -> finalized in JAX
        s1 = jnp.sum(lin_n, axis=0, keepdims=True)           # [1, H]
        s2 = jnp.sum(lin_n * lin_n, axis=0, keepdims=True)    # [1, H]
        stats_ref[...] = jnp.concatenate([s1, s2], axis=0)[None]   # [1, 2, H]


# ---------------- Pass 3: BatchNorm apply + residual + ReLU + mean-pool -------
def bn_pool_kernel(lin_ref, hrow_ref, mu_ref, inv_std_ref, gamma_ref, beta_ref,
                   pool_ref, pooled_ref):
    y = (lin_ref[...] - mu_ref[...]) * inv_std_ref[...] * gamma_ref[...] + beta_ref[...]
    out = jnp.maximum(y + hrow_ref[...], 0.0)                # residual + ReLU
    # per-row-tile partial graph sums (binary pool matrix; divide by counts in JAX)
    pooled_ref[...] = jnp.dot(pool_ref[...], out,
                              preferred_element_type=jnp.float32)[None]


def sagenet1_forward(x_pad, adj01, inv_deg, pool01, graph_counts, params):
    N, INP = x_pad.shape
    H = params["w_emb"].shape[1]
    G = pool01.shape[0]
    n_row = N // TM
    n_col = N // TK

    x_bf16 = x_pad.astype(jnp.bfloat16)
    w_emb = params["w_emb"].astype(jnp.bfloat16)
    # stacked SAGE weight: rows acting on x, then rows acting on aggr
    w_sage = jnp.concatenate([params["w_lin_x"], params["w_lin_a"]],
                             axis=0).astype(jnp.bfloat16)     # [2H, H]

    # ---- pass 1: embedding (row-tiled, parallel) -----------------------------
    h_f32, h_bf16 = pl.pallas_call(
        embed_kernel,
        out_shape=(jax.ShapeDtypeStruct((N, H), jnp.float32),
                   jax.ShapeDtypeStruct((N, H), jnp.bfloat16)),
        grid=(n_row,),
        in_specs=[pl.BlockSpec((TM, INP), lambda i: (i, 0)),
                  pl.BlockSpec((INP, H), lambda i: (0, 0))],
        out_specs=(pl.BlockSpec((TM, H), lambda i: (i, 0)),
                   pl.BlockSpec((TM, H), lambda i: (i, 0))),
        compiler_params=pltpu.CompilerParams(dimension_semantics=("parallel",)),
    )(x_bf16, w_emb)

    # ---- pass 2: tiled A01 @ h, fused SAGE linear, normalize, BN partials ----
    flops = 2 * N * N * H + 2 * N * (2 * H) * H
    bytes_acc = int(adj01.size * 2 + h_bf16.size * 2 * n_row
                    + h_f32.size * 4 + 2 * N * H * 4 + 2 * 2 * H * H)
    lin_norm, stats = pl.pallas_call(
        sage_kernel,
        out_shape=(jax.ShapeDtypeStruct((N, H), jnp.float32),
                   jax.ShapeDtypeStruct((n_row, 2, H), jnp.float32)),
        grid=(n_row, n_col),
        in_specs=[pl.BlockSpec((TM, TK), lambda i, k: (i, k)),     # adjacency tile
                  pl.BlockSpec((TK, H), lambda i, k: (k, 0)),      # h columns (bf16)
                  pl.BlockSpec((TM, H), lambda i, k: (i, 0)),      # h rows (f32)
                  pl.BlockSpec((TM, 1), lambda i, k: (i, 0)),      # 1/deg rows
                  pl.BlockSpec((2 * H, H), lambda i, k: (0, 0)),   # fused SAGE W
                  pl.BlockSpec((1, H), lambda i, k: (0, 0))],      # SAGE bias
        out_specs=(pl.BlockSpec((TM, H), lambda i, k: (i, 0)),
                   pl.BlockSpec((1, 2, H), lambda i, k: (i, 0, 0))),
        scratch_shapes=[pltpu.VMEM((TM, H), jnp.float32)],
        compiler_params=pltpu.CompilerParams(
            dimension_semantics=("parallel", "arbitrary")),
        cost_estimate=pl.CostEstimate(flops=flops, transcendentals=N,
                                      bytes_accessed=bytes_acc),
    )(adj01, h_bf16, h_f32, inv_deg, w_sage, params["b_lin"])

    # ---- full-batch BatchNorm1d statistics (training mode, biased variance) --
    total = jnp.sum(stats, axis=0)                    # [2, H]
    mu = (total[0] / N)[None, :]                      # [1, H]
    var = total[1] / N - mu[0] * mu[0]
    inv_std = jax.lax.rsqrt(var + 1e-5)[None, :]      # [1, H]

    # ---- pass 3: BN apply + residual + ReLU + tiled global mean pool ---------
    pooled_parts = pl.pallas_call(
        bn_pool_kernel,
        out_shape=jax.ShapeDtypeStruct((n_row, G, H), jnp.float32),
        grid=(n_row,),
        in_specs=[pl.BlockSpec((TM, H), lambda i: (i, 0)),
                  pl.BlockSpec((TM, H), lambda i: (i, 0)),
                  pl.BlockSpec((1, H), lambda i: (0, 0)),
                  pl.BlockSpec((1, H), lambda i: (0, 0)),
                  pl.BlockSpec((1, H), lambda i: (0, 0)),
                  pl.BlockSpec((1, H), lambda i: (0, 0)),
                  pl.BlockSpec((G, TM), lambda i: (0, i))],
        out_specs=pl.BlockSpec((1, G, H), lambda i: (i, 0, 0)),
        compiler_params=pltpu.CompilerParams(dimension_semantics=("parallel",)),
    )(lin_norm, h_f32, mu, inv_std, params["gamma"], params["beta"], pool01)

    hg = jnp.sum(pooled_parts, axis=0) / graph_counts[:, None]   # global_mean_pool
    return hg


if __name__ == "__main__":
    # Small shapes consistent with the module: in_dim=64, hidden_dims=[128].
    N, IN_DIM, IN_PAD, HID, NG = 256, 64, 128, 128, 4
    nodes_per_graph = N // NG

    # --- synthetic graph: ring per graph, self-loops already included ---------
    src, dst = [], []
    for g in range(NG):
        base = g * nodes_per_graph
        for i in range(nodes_per_graph):
            u = base + i
            nxt = base + (i + 1) % nodes_per_graph
            prv = base + (i - 1) % nodes_per_graph
            src += [u, u, u]           # messages leave u
            dst += [u, nxt, prv]       # received by u (self-loop), next, prev
    src = np.asarray(src, dtype=np.int32)
    dst = np.asarray(dst, dtype=np.int32)
    batch = np.repeat(np.arange(NG), nodes_per_graph)   # [N]

    # Binary adjacency (rows = destination) + exact f32 inverse in-degree.
    adj01_np = np.zeros((N, N), dtype=np.float32)
    for s, d in zip(src, dst):
        adj01_np[d, s] = 1.0
    deg = np.maximum(adj01_np.sum(axis=1, keepdims=True), 1.0)
    inv_deg_np = (1.0 / deg).astype(np.float32)          # [N, 1]

    # Binary pooling matrix + per-graph node counts (mean pool = sum / count).
    pool01_np = np.zeros((NG, N), dtype=np.float32)
    for i, b in enumerate(batch):
        pool01_np[b, i] = 1.0
    counts_np = pool01_np.sum(axis=1).astype(np.float32)  # [NG]

    # --- deterministic parameters & inputs ------------------------------------
    key = jax.random.PRNGKey(0)
    ks = jax.random.split(key, 8)

    def init(k, shape, fan_in):
        return (jax.random.uniform(k, shape, jnp.float32, -1.0, 1.0) /
                np.sqrt(fan_in)).astype(jnp.float32)

    x = jax.random.normal(ks[0], (N, IN_DIM), dtype=jnp.float32)
    x_pad = jnp.pad(x, ((0, 0), (0, IN_PAD - IN_DIM)))            # lane-dense input

    w_emb = init(ks[2], (IN_DIM, HID), IN_DIM)                    # embedding_h (no bias)
    w_emb_pad = jnp.pad(w_emb, ((0, IN_PAD - IN_DIM), (0, 0)))    # zero rows: exact

    params = {
        "w_emb":   w_emb_pad,                                     # [IN_PAD, HID]
        "w_lin_x": init(ks[5], (HID, HID), 2 * HID),              # SAGE linear (x half)
        "w_lin_a": init(ks[6], (HID, HID), 2 * HID),              # SAGE linear (aggr half)
        "b_lin":   init(ks[7], (1, HID), 2 * HID),                # SAGE linear bias
        "gamma":   jnp.ones((1, HID), jnp.float32),               # BatchNorm1d weight
        "beta":    jnp.zeros((1, HID), jnp.float32),              # BatchNorm1d bias
    }

    adj01 = jnp.asarray(adj01_np, dtype=jnp.bfloat16)   # 0/1 exact in bf16
    inv_deg = jnp.asarray(inv_deg_np)
    pool01 = jnp.asarray(pool01_np)
    counts = jnp.asarray(counts_np)

    hg = sagenet1_forward(x_pad, adj01, inv_deg, pool01, counts, params)
    hg = jax.block_until_ready(hg)

    assert hg.shape == (NG, HID) and bool(jnp.all(jnp.isfinite(hg)))
    print("KERNEL_OK")
</pallas_src>

<mosaic_0001>
module attributes {stable_mosaic.version = 11 : i64} {
  func.func @embed_kernel(%arg0: i32, %arg1: memref<128x128xbf16, #tpu.memory_space<vmem>>, %arg2: memref<128x128xbf16, #tpu.memory_space<vmem>>, %arg3: memref<128x128xf32, #tpu.memory_space<vmem>>, %arg4: memref<128x128xbf16, #tpu.memory_space<vmem>>) attributes {dimension_semantics = [#tpu.dimension_semantics<parallel>], iteration_bounds = array<i64: 2>, scalar_prefetch = 0 : i64, scratch_operands = 0 : i64, tpu.core_type = #tpu.core_type<tc>, window_params = [{transform_indices = @transform_0, window_bounds = array<i64: 128, 128>}, {pipeline_mode = #tpu.pipeline_mode<synchronous>, transform_indices = @transform_1, window_bounds = array<i64: 128, 128>}, {transform_indices = @transform_2, window_bounds = array<i64: 128, 128>}, {transform_indices = @transform_3, window_bounds = array<i64: 128, 128>}]} {
    %c0 = arith.constant 0 : index
    %c0_0 = arith.constant 0 : index
    %0 = vector.load %arg1[%c0, %c0_0] : memref<128x128xbf16, #tpu.memory_space<vmem>>, vector<128x128xbf16>
    %c0_1 = arith.constant 0 : index
    %c0_2 = arith.constant 0 : index
    %1 = vector.load %arg2[%c0_1, %c0_2] : memref<128x128xbf16, #tpu.memory_space<vmem>>, vector<128x128xbf16>
    %cst = arith.constant dense<0.000000e+00> : vector<128x128xf32>
    %2 = tpu.matmul %0, %1, %cst {dimension_numbers = #tpu.dot_dimension_numbers<[1], [0], [0], [1], [0, 0, 1, 1], [], []>} : vector<128x128xbf16>, vector<128x128xbf16>, vector<128x128xf32> -> vector<128x128xf32>
    %c0_3 = arith.constant 0 : index
    %c0_4 = arith.constant 0 : index
    %3 = vector.load %arg3[%c0_3, %c0_4] : memref<128x128xf32, #tpu.memory_space<vmem>>, vector<128x128xf32>
    tpu.vector_store %arg3[%c0_3, %c0_4], %2 {strides = array<i32>} : memref<128x128xf32, #tpu.memory_space<vmem>>, vector<128x128xf32>,
    %4 = arith.truncf %2 : vector<128x128xf32> to vector<128x128xbf16>
    %c0_5 = arith.constant 0 : index
    %c0_6 = arith.constant 0 : index
    %5 = vector.load %arg4[%c0_5, %c0_6] : memref<128x128xbf16, #tpu.memory_space<vmem>>, vector<128x128xbf16>
    tpu.vector_store %arg4[%c0_5, %c0_6], %4 {strides = array<i32>} : memref<128x128xbf16, #tpu.memory_space<vmem>>, vector<128x128xbf16>,
    return
  }
  func.func @transform_0(%arg0: i32) -> (i32, i32) {
    %c0_i32 = arith.constant 0 : i32
    %c0_i32_0 = arith.constant 0 : i32
    return %arg0, %c0_i32 : i32, i32
  }
  func.func @transform_1(%arg0: i32) -> (i32, i32) {
    %c0_i32 = arith.constant 0 : i32
    %c0_i32_0 = arith.constant 0 : i32
    %c0_i32_1 = arith.constant 0 : i32
    return %c0_i32, %c0_i32_0 : i32, i32
  }
  func.func @transform_2(%arg0: i32) -> (i32, i32) {
    %c0_i32 = arith.constant 0 : i32
    %c0_i32_0 = arith.constant 0 : i32
    return %arg0, %c0_i32 : i32, i32
  }
  func.func @transform_3(%arg0: i32) -> (i32, i32) {
    %c0_i32 = arith.constant 0 : i32
    %c0_i32_0 = arith.constant 0 : i32
    return %arg0, %c0_i32 : i32, i32
  }
}

</mosaic_0001>

<llo_original>
// kernel: tpu_custom_call.1
$region0: #{tpu_custom_call.1}
  #allocation0 [shape = 'u32[]', space=smem, size = 0x4, offset = 0x4, fixed_abs, tag = 'smem constant byte address 0x4 - core index']
  #allocation1 [shape = 'u32[72,128]{1,0:T(1,128)}', space=vmem, size = 0x9000, scoped, tag = 'internal scratch']
  %s0 = inlined_call_operand.hbm [shape: bf16[256,128], index: 0, kind: input, shape index: {}]
  %s1 = inlined_call_operand.hbm [shape: bf16[128,128], index: 1, kind: input, shape index: {}]
  %s2 = inlined_call_operand.hbm [shape: f32[256,128], index: 2, kind: output, shape index: {0}]
  %s3 = inlined_call_operand.hbm [shape: bf16[256,128], index: 3, kind: output, shape index: {1}]
  %4 = xla_tuple %s2, %s3
  %s5 = sld [smem:[#allocation0]]
  $region57: #{tpu_custom_call.1} parent=0
    _
  %s7 = ssub.s32 1, %s5
  %s8 = scalar_select 0, %s7, %s5
  $region1: #{tpu_custom_call.1} parent=0
    #allocation2 [shape = 'u8[65536]{0}', space=vmem, size = 0x10000, scoped, tag = 'input window, operand 0']
    #allocation3 [shape = 's32[2]{0}', space=sflag, size = 0x8, scoped, tag = 'scoped memory for tpu_custom_call.1']
    #allocation4 [shape = 's32[2]{0}', space=sflag, size = 0x8, scoped, tag = 'scoped memory for tpu_custom_call.1']
    #allocation5 [shape = 'u8[32768]{0}', space=vmem, size = 0x8000, scoped, tag = 'input window, operand 1, single buffered']
    #allocation6 [shape = 's32[1]{0}', space=sflag, size = 0x4, scoped, tag = 'scoped memory for tpu_custom_call.1']
    #allocation7 [shape = 'u8[131072]{0}', space=vmem, size = 0x20000, scoped, tag = 'output window, operand 0']
    #allocation8 [shape = 'u8[65536]{0}', space=vmem, size = 0x10000, scoped, tag = 'output window, operand 1']
    #allocation9 [shape = 's32[2]{0}', space=sflag, size = 0x8, scoped, tag = 'scoped memory for tpu_custom_call.1']
    %9 = vsyncpa [#allocation3], 0
    %s10 = scalar_lea.sflag [#allocation3], 1
    %11 = vsyncpa %s10, 0
    %12 = vsyncpa [#allocation6], 0
    %13 = vsyncpa [#allocation4], 0
    %s14 = scalar_lea.sflag [#allocation4], 1
    %15 = vsyncpa %s14, 0
    %16 = vsyncpa [#allocation9], 0
    %s17 = scalar_lea.sflag [#allocation9], 1
    %18 = vsyncpa %s17, 0
    loop: start=0, step=1, limit=4
    $region2: #{tpu_custom_call.1} parent=1 // loop_pre_header
      _
    $region3: #{tpu_custom_call.1} parent=1 // loop_header
      %s20 = sphi 0, %s24
      %p21 = scmp.ge.s32.totalorder %s20, 4
      %s30 = sphi 0, %s32
      %s33 = sphi 0, %s30
      %s34 = sphi 0, %s33
      %s50 = sphi 0, %s34
      %s54 = sphi 0, %s54
      %s56 = sphi 0, %s54
      %s57 = sphi 0, %s56
      %s71 = sphi 0, %s57
      %s77 = sphi 0, %s79
      %s80 = sphi 0, %s77
      %s81 = sphi 0, %s80
      %s97 = sphi 0, %s81
      %s103 = sphi 0, %s105
      %s106 = sphi 0, %s103
      %s107 = sphi 0, %s106
      %s123 = sphi 0, %s107
    $region4: #{tpu_custom_call.1} parent=1 // loop_header_branch
      %23 = sbr.rel (%p21) target = $region8
    $region5: #{tpu_custom_call.1} parent=1 // loop_body
      %s25 = ssub.s32 %s20, 1
      %s26 = ssub.s32 %s20, 2
      %s27 = sadd.s32 %s20, 1
      %s28 = ssub.s32 %s20, %s27
      %p29 = scmp.eq.s32.totalorder %s28, 0
      %s31 = sadd.s32 %s30, 1
      %s32 = scalar_select %p29, %s30, %s31
      %p35 = pneg %p29
      %p36 = scmp.eq.s32.totalorder %s20, 1
      %p37 = por %p35, %p36
      %p38 = scmp.ne.s32.totalorder %s30, %s33
      %p39 = scmp.eq.s32.totalorder %s20, 0
      %p40 = por %p38, %p39
      %p41 = scmp.ne.s32.totalorder %s30, %s33
      %p42 = scmp.eq.s32.totalorder %s25, 1
      %p43 = por %p41, %p42
      %p44 = scmp.ne.s32.totalorder %s33, %s34
      %p45 = scmp.eq.s32.totalorder %s25, 0
      %p46 = por %p44, %p45
      %p47 = scmp.ne.s32.totalorder %s33, %s34
      %p48 = scmp.eq.s32.totalorder %s26, 1
      %p49 = por %p47, %p48
      %p51 = scmp.ne.s32.totalorder %s34, %s50
      %p52 = scmp.eq.s32.totalorder %s26, 0
      %p53 = por %p51, %p52
      %s55 = sadd.s32 %s54, 1
      %p58 = scmp.eq.s32.totalorder %s20, 1
      %p59 = scmp.ne.s32.totalorder %s54, %s56
      %p60 = scmp.eq.s32.totalorder %s20, 0
      %p61 = por %p59, %p60
      %p62 = scmp.ne.s32.totalorder %s54, %s56
      %p63 = scmp.eq.s32.totalorder %s25, 1
      %p64 = por %p62, %p63
      %p65 = scmp.ne.s32.totalorder %s56, %s57
      %p66 = scmp.eq.s32.totalorder %s25, 0
      %p67 = por %p65, %p66
      %p68 = scmp.ne.s32.totalorder %s56, %s57
      %p69 = scmp.eq.s32.totalorder %s26, 1
      %p70 = por %p68, %p69
      %p72 = scmp.ne.s32.totalorder %s57, %s71
      %p73 = scmp.eq.s32.totalorder %s26, 0
      %p74 = por %p72, %p73
      %s75 = ssub.s32 %s20, %s27
      %p76 = scmp.eq.s32.totalorder %s75, 0
      %s78 = sadd.s32 %s77, 1
      %s79 = scalar_select %p76, %s77, %s78
      %p82 = pneg %p76
      %p83 = scmp.eq.s32.totalorder %s20, 1
      %p84 = por %p82, %p83
      %p85 = scmp.ne.s32.totalorder %s77, %s80
      %p86 = scmp.eq.s32.totalorder %s20, 0
      %p87 = por %p85, %p86
      %p88 = scmp.ne.s32.totalorder %s77, %s80
      %p89 = scmp.eq.s32.totalorder %s25, 1
      %p90 = por %p88, %p89
      %p91 = scmp.ne.s32.totalorder %s80, %s81
      %p92 = scmp.eq.s32.totalorder %s25, 0
      %p93 = por %p91, %p92
      %p94 = scmp.ne.s32.totalorder %s80, %s81
      %p95 = scmp.eq.s32.totalorder %s26, 1
      %p96 = por %p94, %p95
      %p98 = scmp.ne.s32.totalorder %s81, %s97
      %p99 = scmp.eq.s32.totalorder %s26, 0
      %p100 = por %p98, %p99
      %s101 = ssub.s32 %s20, %s27
      %p102 = scmp.eq.s32.totalorder %s101, 0
      %s104 = sadd.s32 %s103, 1
      %s105 = scalar_select %p102, %s103, %s104
      %p108 = pneg %p102
      %p109 = scmp.eq.s32.totalorder %s20, 1
      %p110 = por %p108, %p109
      %p111 = scmp.ne.s32.totalorder %s103, %s106
      %p112 = scmp.eq.s32.totalorder %s20, 0
      %p113 = por %p111, %p112
      %p114 = scmp.ne.s32.totalorder %s103, %s106
      %p115 = scmp.eq.s32.totalorder %s25, 1
      %p116 = por %p114, %p115
      %p117 = scmp.ne.s32.totalorder %s106, %s107
      %p118 = scmp.eq.s32.totalorder %s25, 0
      %p119 = por %p117, %p118
      %p120 = scmp.ne.s32.totalorder %s106, %s107
      %p121 = scmp.eq.s32.totalorder %s26, 1
      %p122 = por %p120, %p121
      %p124 = scmp.ne.s32.totalorder %s107, %s123
      %p125 = scmp.eq.s32.totalorder %s26, 0
      %p126 = por %p124, %p125
      %p127 = scmp.le.s32.totalorder 1, %s20
      %p128 = scmp.lt.s32.totalorder %s20, 3
      %p129 = pnand %p127, %p128
      %p130 = pneg %p129
      // Predicated region
      $region9: #{tpu_custom_call.1} parent=5 // pred_check
        _
      $region10: #{tpu_custom_call.1} parent=5 // pred_check_branch
        %132 = sbr.rel (%p129) target = $region12
      $region11: #{tpu_custom_call.1} parent=5 // pred_region
        %s133 = ssub.s32 %s20, 1
        // Predicated region
        $region13: #{tpu_custom_call.1} parent=11 // pred_check
          %p134 = pneg %p67
        $region14: #{tpu_custom_call.1} parent=11 // pred_check_branch
          %136 = sbr.rel (%p134) target = $region16
        $region15: #{tpu_custom_call.1} parent=11 // pred_region
          %138 = vsyncadd [#allocation6], 0
          %s139 = sshll.u32 %s1, 4
          %s140 = int_to_ptr.hbm [resolvable:$true] %s139
          %s141 = sshll.u32 [#allocation5], 4
          %s142 = int_to_ptr.vmem [resolvable:$true] %s141
          %147 = dma.hbm_to_vmem [thread:$0]  %s140, 1024, %s142, [#allocation6], 64, 64, 4
        $region16: #{tpu_custom_call.1} parent=11 // pred_fallthru
          _
      $region12: #{tpu_custom_call.1} parent=5 // pred_fallthru
        _
      %p148 = scmp.lt.s32.totalorder %s20, 2
      // Predicated region
      $region17: #{tpu_custom_call.1} parent=5 // pred_check
        %p149 = pneg %p148
      $region18: #{tpu_custom_call.1} parent=5 // pred_check_branch
        %151 = sbr.rel (%p149) target = $region20
      $region19: #{tpu_custom_call.1} parent=5 // pred_region
        // Predicated region
        $region21: #{tpu_custom_call.1} parent=19 // pred_check
          %p152 = pneg %p40
        $region22: #{tpu_custom_call.1} parent=19 // pred_check_branch
          %154 = sbr.rel (%p152) target = $region24
        $region23: #{tpu_custom_call.1} parent=19 // pred_region
          %s155 = sand.u32 %s30, 1
          %s156 = scalar_lea.sflag [#allocation3], %s155
          %s157 = sand.u32 %s30, 1
          %s158 = smul.addr %s157, 64
          %s159 = scalar_lea.vmem [#allocation2], %s158
          %s160 = smul.u32 16, %s20
          %162 = vsyncadd %s156, 0
          %s163 = smul.addr %s160, 4
          %s164 = scalar_lea.hbm %s0, %s163
          %s165 = sshll.u32 %s164, 4
          %s166 = int_to_ptr.hbm [resolvable:$true] %s165
          %s167 = sshll.u32 %s159, 4
          %s168 = int_to_ptr.vmem [resolvable:$true] %s167
          %173 = dma.hbm_to_vmem [thread:$0]  %s166, 1024, %s168, %s156, 64, 64, 4
        $region24: #{tpu_custom_call.1} parent=19 // pred_fallthru
          _
      $region20: #{tpu_custom_call.1} parent=5 // pred_fallthru
        _
      %p174 = scmp.le.s32.totalorder 1, %s20
      %p175 = scmp.lt.s32.totalorder %s20, 3
      %p176 = pnand %p174, %p175
      %p177 = pneg %p176
      // Predicated region
      $region25: #{tpu_custom_call.1} parent=5 // pred_check
        _
      $region26: #{tpu_custom_call.1} parent=5 // pred_check_branch
        %179 = sbr.rel (%p176) target = $region28
      $region27: #{tpu_custom_call.1} parent=5 // pred_region
        %s180 = ssub.s32 %s20, 1
        %s181 = sand.u32 %s33, 1
        %s182 = scalar_lea.sflag [#allocation3], %s181
        %s183 = sand.u32 %s33, 1
        %s184 = smul.addr %s183, 64
        %s185 = scalar_lea.vmem [#allocation2], %s184
        // Predicated region
        $region29: #{tpu_custom_call.1} parent=27 // pred_check
          %p186 = pneg %p46
        $region30: #{tpu_custom_call.1} parent=27 // pred_check_branch
          %188 = sbr.rel (%p186) target = $region32
        $region31: #{tpu_custom_call.1} parent=27 // pred_region
          %190 = dma.done %s182, 1024
        $region32: #{tpu_custom_call.1} parent=27 // pred_fallthru
          _
        // Predicated region
        $region33: #{tpu_custom_call.1} parent=27 // pred_check
          %p191 = pneg %p67
        $region34: #{tpu_custom_call.1} parent=27 // pred_check_branch
          %193 = sbr.rel (%p191) target = $region36
        $region35: #{tpu_custom_call.1} parent=27 // pred_region
          %195 = dma.done [#allocation6], 1024
        $region36: #{tpu_custom_call.1} parent=27 // pred_fallthru
          _
        %s196 = sand.u32 %s33, 1
        %s197 = scalar_lea.sflag [#allocation3], %s196
        %s198 = sand.u32 %s33, 1
        %s199 = smul.addr %s198, 64
        %s200 = scalar_lea.vmem [#allocation2], %s199
        %p201 = pneg %p46
        %p202 = pneg %p43
        %p203 = pneg %p67
        %p204 = pneg %p64
        %p205 = pneg %p93
        %p206 = pneg %p90
        %s207 = sand.u32 %s80, 1
        %s208 = scalar_lea.sflag [#allocation4], %s207
        %s209 = sand.u32 %s80, 1
        %s210 = smul.addr %s209, 128
        %s211 = scalar_lea.vmem [#allocation7], %s210
        %p212 = pneg %p119
        %p213 = pneg %p116
        %s214 = sand.u32 %s106, 1
        %s215 = scalar_lea.sflag [#allocation9], %s214
        %s216 = sand.u32 %s106, 1
        %s217 = smul.addr %s216, 64
        %s218 = scalar_lea.vmem [#allocation8], %s217
        %s219 = smul.u32 16, %s25
        %s220 = smul.u32 16, %s25
        %s221 = smul.u32 16, %s25
        %v222 = vld [vmem:[%s185] sm:$0xf]
        %v223 = vld [vmem:[%s185 + $0x4] sm:$0xf]
        %v224 = vld [vmem:[%s185 + $0x8] sm:$0xf]
        %v225 = vld [vmem:[%s185 + $0xc] sm:$0xf]
        %v226 = vld [vmem:[%s185 + $0x10] sm:$0xf]
        %v227 = vld [vmem:[%s185 + $0x14] sm:$0xf]
        %v228 = vld [vmem:[%s185 + $0x18] sm:$0xf]
        %v229 = vld [vmem:[%s185 + $0x1c] sm:$0xf]
        %v230 = vld [vmem:[%s185 + $0x20] sm:$0xf]
        %v231 = vld [vmem:[%s185 + $0x24] sm:$0xf]
        %v232 = vld [vmem:[%s185 + $0x28] sm:$0xf]
        %v233 = vld [vmem:[%s185 + $0x2c] sm:$0xf]
        %v234 = vld [vmem:[%s185 + $0x30] sm:$0xf]
        %v235 = vld [vmem:[%s185 + $0x34] sm:$0xf]
        %v236 = vld [vmem:[%s185 + $0x38] sm:$0xf]
        %v237 = vld [vmem:[%s185 + $0x3c] sm:$0xf]
        %v238 = vld [vmem:[#allocation5] sm:$0xf]
        %v239 = vld [vmem:[#allocation5 + $0x4] sm:$0xf]
        %v240 = vld [vmem:[#allocation5 + $0x8] sm:$0xf]
        %v241 = vld [vmem:[#allocation5 + $0xc] sm:$0xf]
        %v242 = vld [vmem:[#allocation5 + $0x10] sm:$0xf]
        %v243 = vld [vmem:[#allocation5 + $0x14] sm:$0xf]
        %v244 = vld [vmem:[#allocation5 + $0x18] sm:$0xf]
        %v245 = vld [vmem:[#allocation5 + $0x1c] sm:$0xf]
        %v246 = vld [vmem:[#allocation5 + $0x20] sm:$0xf]
        %v247 = vld [vmem:[#allocation5 + $0x24] sm:$0xf]
        %v248 = vld [vmem:[#allocation5 + $0x28] sm:$0xf]
        %v249 = vld [vmem:[#allocation5 + $0x2c] sm:$0xf]
        %v250 = vld [vmem:[#allocation5 + $0x30] sm:$0xf]
        %v251 = vld [vmem:[#allocation5 + $0x34] sm:$0xf]
        %v252 = vld [vmem:[#allocation5 + $0x38] sm:$0xf]
        %v253 = vld [vmem:[#allocation5 + $0x3c] sm:$0xf]
        %v270 = vunpack.c.l.b16 %v222
        %v271 = vunpack.c.l.b16 %v223
        %v272 = vunpack.c.l.b16 %v224
        %v273 = vunpack.c.l.b16 %v225
        %v274 = vunpack.c.l.b16 %v226
        %v275 = vunpack.c.l.b16 %v227
        %v276 = vunpack.c.l.b16 %v228
        %v277 = vunpack.c.l.b16 %v229
        %v278 = vunpack.c.l.b16 %v230
        %v279 = vunpack.c.l.b16 %v231
        %v280 = vunpack.c.l.b16 %v232
        %v281 = vunpack.c.l.b16 %v233
        %v282 = vunpack.c.l.b16 %v234
        %v283 = vunpack.c.l.b16 %v235
        %v284 = vunpack.c.l.b16 %v236
        %v285 = vunpack.c.l.b16 %v237
        %v286 = vpack.c.b16 %v271, %v270
        %v287 = vpack.c.b16 %v273, %v272
        %v288 = vpack.c.b16 %v275, %v274
        %v289 = vpack.c.b16 %v277, %v276
        %v290 = vpack.c.b16 %v279, %v278
        %v291 = vpack.c.b16 %v281, %v280
        %v292 = vpack.c.b16 %v283, %v282
        %v293 = vpack.c.b16 %v285, %v284
        %v318 = vunpack.c.l.b16 %v238
        %v319 = vunpack.c.l.b16 %v239
        %v320 = vunpack.c.l.b16 %v240
        %v321 = vunpack.c.l.b16 %v241
        %v322 = vunpack.c.l.b16 %v242
        %v323 = vunpack.c.l.b16 %v243
        %v324 = vunpack.c.l.b16 %v244
        %v325 = vunpack.c.l.b16 %v245
        %v326 = vunpack.c.l.b16 %v246
        %v327 = vunpack.c.l.b16 %v247
        %v328 = vunpack.c.l.b16 %v248
        %v329 = vunpack.c.l.b16 %v249
        %v330 = vunpack.c.l.b16 %v250
        %v331 = vunpack.c.l.b16 %v251
        %v332 = vunpack.c.l.b16 %v252
        %v333 = vunpack.c.l.b16 %v253
        %v334 = vpack.c.b16 %v319, %v318
        %v335 = vpack.c.b16 %v321, %v320
        %v336 = vpack.c.b16 %v323, %v322
        %v337 = vpack.c.b16 %v325, %v324
        %v338 = vpack.c.b16 %v327, %v326
        %v339 = vpack.c.b16 %v329, %v328
        %v340 = vpack.c.b16 %v331, %v330
        %v341 = vpack.c.b16 %v333, %v332
        %350 = vmatpush.bf16.msra.mxu0 %v341
        %351 = vmatpush.bf16.msra.mxu0 %v340
        %352 = vmatpush.bf16.msra.mxu0 %v339
        %353 = vmatpush.bf16.msra.mxu0 %v338
        %354 = vmatpush.bf16.msra.mxu0 %v337
        %355 = vmatpush.bf16.msra.mxu0 %v336
        %356 = vmatpush.bf16.msra.mxu0 %v335
        %357 = vmatpush.bf16.msra.mxu0 %v334
        %358 = vmatmul.bf16.gmra.mxu0 %v286
        %v359 = vpop.f32.mrf.mxu0
        %v360 = vadd.f32 0.0, %v359
        %v361 = vpop.f32.mrf.mxu0
        %v362 = vadd.f32 0.0, %v361
        %363 = vmatmul.bf16.gmra.mxu0 %v287
        %v364 = vpop.f32.mrf.mxu0
        %v365 = vadd.f32 0.0, %v364
        %v366 = vpop.f32.mrf.mxu0
        %v367 = vadd.f32 0.0, %v366
        %368 = vmatmul.bf16.gmra.mxu0 %v288
        %v369 = vpop.f32.mrf.mxu0
        %v370 = vadd.f32 0.0, %v369
        %v371 = vpop.f32.mrf.mxu0
        %v372 = vadd.f32 0.0, %v371
        %373 = vmatmul.bf16.gmra.mxu0 %v289
        %v374 = vpop.f32.mrf.mxu0
        %v375 = vadd.f32 0.0, %v374
        %v376 = vpop.f32.mrf.mxu0
        %v377 = vadd.f32 0.0, %v376
        %378 = vmatmul.bf16.gmra.mxu0 %v290
        %v379 = vpop.f32.mrf.mxu0
        %v380 = vadd.f32 0.0, %v379
        %v381 = vpop.f32.mrf.mxu0
        %v382 = vadd.f32 0.0, %v381
        %383 = vmatmul.bf16.gmra.mxu0 %v291
        %v384 = vpop.f32.mrf.mxu0
        %v385 = vadd.f32 0.0, %v384
        %v386 = vpop.f32.mrf.mxu0
        %v387 = vadd.f32 0.0, %v386
        %388 = vmatmul.bf16.gmra.mxu0 %v292
        %v389 = vpop.f32.mrf.mxu0
        %v390 = vadd.f32 0.0, %v389
        %v391 = vpop.f32.mrf.mxu0
        %v392 = vadd.f32 0.0, %v391
        %393 = vmatmul.bf16.gmra.mxu0 %v293
        %v394 = vpop.f32.mrf.mxu0
        %v395 = vadd.f32 0.0, %v394
        %v396 = vpop.f32.mrf.mxu0
        %v397 = vadd.f32 0.0, %v396
        %398 = vdwg.mxu0
        %399 = vst [vmem:[%s211] sm:$0xff] %v360
        %400 = vst [vmem:[%s211 + $0x8] sm:$0xff] %v362
        %401 = vst [vmem:[%s211 + $0x10] sm:$0xff] %v365
        %402 = vst [vmem:[%s211 + $0x18] sm:$0xff] %v367
        %403 = vst [vmem:[%s211 + $0x20] sm:$0xff] %v370
        %404 = vst [vmem:[%s211 + $0x28] sm:$0xff] %v372
        %405 = vst [vmem:[%s211 + $0x30] sm:$0xff] %v375
        %406 = vst [vmem:[%s211 + $0x38] sm:$0xff] %v377
        %407 = vst [vmem:[%s211 + $0x40] sm:$0xff] %v380
        %408 = vst [vmem:[%s211 + $0x48] sm:$0xff] %v382
        %409 = vst [vmem:[%s211 + $0x50] sm:$0xff] %v385
        %410 = vst [vmem:[%s211 + $0x58] sm:$0xff] %v387
        %411 = vst [vmem:[%s211 + $0x60] sm:$0xff] %v390
        %412 = vst [vmem:[%s211 + $0x68] sm:$0xff] %v392
        %413 = vst [vmem:[%s211 + $0x70] sm:$0xff] %v395
        %414 = vst [vmem:[%s211 + $0x78] sm:$0xff] %v397
        %v415 = vpack.c.bf16 %v360, %v360
        %v416 = vpack.c.bf16 %v362, %v362
        %v417 = vpack.c.bf16 %v365, %v365
        %v418 = vpack.c.bf16 %v367, %v367
        %v419 = vpack.c.bf16 %v370, %v370
        %v420 = vpack.c.bf16 %v372, %v372
        %v421 = vpack.c.bf16 %v375, %v375
        %v422 = vpack.c.bf16 %v377, %v377
        %v423 = vpack.c.bf16 %v380, %v380
        %v424 = vpack.c.bf16 %v382, %v382
        %v425 = vpack.c.bf16 %v385, %v385
        %v426 = vpack.c.bf16 %v387, %v387
        %v427 = vpack.c.bf16 %v390, %v390
        %v428 = vpack.c.bf16 %v392, %v392
        %v429 = vpack.c.bf16 %v395, %v395
        %v430 = vpack.c.bf16 %v397, %v397
        %431 = vst [vmem:[%s218] sm:$0xf] %v415
        %432 = vst [vmem:[%s218 + $0x4] sm:$0xf] %v416
        %433 = vst [vmem:[%s218 + $0x8] sm:$0xf] %v417
        %434 = vst [vmem:[%s218 + $0xc] sm:$0xf] %v418
        %435 = vst [vmem:[%s218 + $0x10] sm:$0xf] %v419
        %436 = vst [vmem:[%s218 + $0x14] sm:$0xf] %v420
        %437 = vst [vmem:[%s218 + $0x18] sm:$0xf] %v421
        %438 = vst [vmem:[%s218 + $0x1c] sm:$0xf] %v422
        %439 = vst [vmem:[%s218 + $0x20] sm:$0xf] %v423
        %440 = vst [vmem:[%s218 + $0x24] sm:$0xf] %v424
        %441 = vst [vmem:[%s218 + $0x28] sm:$0xf] %v425
        %442 = vst [vmem:[%s218 + $0x2c] sm:$0xf] %v426
        %443 = vst [vmem:[%s218 + $0x30] sm:$0xf] %v427
        %444 = vst [vmem:[%s218 + $0x34] sm:$0xf] %v428
        %445 = vst [vmem:[%s218 + $0x38] sm:$0xf] %v429
        %446 = vst [vmem:[%s218 + $0x3c] sm:$0xf] %v430
        %s447 = sand.u32 %s80, 1
        %s448 = scalar_lea.sflag [#allocation4], %s447
        %s449 = sand.u32 %s80, 1
        %s450 = smul.addr %s449, 128
        %s451 = scalar_lea.vmem [#allocation7], %s450
        %s452 = sand.u32 %s106, 1
        %s453 = scalar_lea.sflag [#allocation9], %s452
        %s454 = sand.u32 %s106, 1
        %s455 = smul.addr %s454, 64
        %s456 = scalar_lea.vmem [#allocation8], %s455
        // Predicated region
        $region37: #{tpu_custom_call.1} parent=27 // pred_check
          %p457 = pneg %p90
        $region38: #{tpu_custom_call.1} parent=27 // pred_check_branch
          %459 = sbr.rel (%p457) target = $region40
        $region39: #{tpu_custom_call.1} parent=27 // pred_region
          %s460 = smul.u32 16, %s25
          %462 = vsyncadd %s448, 0
          %s463 = smul.addr %s460, 8
          %s464 = scalar_lea.hbm %s2, %s463
          %s465 = sshll.u32 %s451, 4
          %s466 = int_to_ptr.vmem [resolvable:$true] %s465
          %s467 = sshll.u32 %s464, 4
          %s468 = int_to_ptr.hbm [resolvable:$true] %s467
          %473 = dma.vmem_to_hbm [thread:$0]  %s466, 2048, %s468, %s448, 128, 128, 8
        $region40: #{tpu_custom_call.1} parent=27 // pred_fallthru
          _
        // Predicated region
        $region41: #{tpu_custom_call.1} parent=27 // pred_check
          %p474 = pneg %p116
        $region42: #{tpu_custom_call.1} parent=27 // pred_check_branch
          %476 = sbr.rel (%p474) target = $region44
        $region43: #{tpu_custom_call.1} parent=27 // pred_region
          %s477 = smul.u32 16, %s25
          %479 = vsyncadd %s453, 0
          %s480 = smul.addr %s477, 4
          %s481 = scalar_lea.hbm %s3, %s480
          %s482 = sshll.u32 %s456, 4
          %s483 = int_to_ptr.vmem [resolvable:$true] %s482
          %s484 = sshll.u32 %s481, 4
          %s485 = int_to_ptr.hbm [resolvable:$true] %s484
          %490 = dma.vmem_to_hbm [thread:$0]  %s483, 1024, %s485, %s453, 64, 64, 4
        $region44: #{tpu_custom_call.1} parent=27 // pred_fallthru
          _
      $region28: #{tpu_custom_call.1} parent=5 // pred_fallthru
        _
      %p491 = scmp.le.s32.totalorder 2, %s20
      // Predicated region
      $region45: #{tpu_custom_call.1} parent=5 // pred_check
        %p492 = pneg %p491
      $region46: #{tpu_custom_call.1} parent=5 // pred_check_branch
        %494 = sbr.rel (%p492) target = $region48
      $region47: #{tpu_custom_call.1} parent=5 // pred_region
        %s495 = ssub.s32 %s20, 2
        // Predicated region
        $region49: #{tpu_custom_call.1} parent=47 // pred_check
          %p496 = pneg %p96
        $region50: #{tpu_custom_call.1} parent=47 // pred_check_branch
          %498 = sbr.rel (%p496) target = $region52
        $region51: #{tpu_custom_call.1} parent=47 // pred_region
          %s499 = sand.u32 %s81, 1
          %s500 = scalar_lea.sflag [#allocation4], %s499
          %s501 = sand.u32 %s81, 1
          %s502 = smul.addr %s501, 128
          %s503 = scalar_lea.vmem [#allocation7], %s502
          %505 = dma.done %s500, 2048
        $region52: #{tpu_custom_call.1} parent=47 // pred_fallthru
          _
        // Predicated region
        $region53: #{tpu_custom_call.1} parent=47 // pred_check
          %p506 = pneg %p122
        $region54: #{tpu_custom_call.1} parent=47 // pred_check_branch
          %508 = sbr.rel (%p506) target = $region56
        $region55: #{tpu_custom_call.1} parent=47 // pred_region
          %s509 = sand.u32 %s107, 1
          %s510 = scalar_lea.sflag [#allocation9], %s509
          %s511 = sand.u32 %s107, 1
          %s512 = smul.addr %s511, 64
          %s513 = scalar_lea.vmem [#allocation8], %s512
          %515 = dma.done %s510, 1024
        $region56: #{tpu_custom_call.1} parent=47 // pred_fallthru
          _
      $region48: #{tpu_custom_call.1} parent=5 // pred_fallthru
        _
    $region6: #{tpu_custom_call.1} parent=1 // loop_footer
      %s24 = sadd.s32 1, %s20
    $region7: #{tpu_custom_call.1} parent=1 // loop_footer_branch
      %19 = sbr.rel target = $region3
    $region8: #{tpu_custom_call.1} parent=1 // loop_exit
      _
    %516 = vsyncpa [#allocation3], 1
    %s517 = scalar_lea.sflag [#allocation3], 1
    %518 = vsyncpa %s517, 1
    %519 = vsyncpa [#allocation6], 1
    %520 = vsyncpa [#allocation4], 1
    %s521 = scalar_lea.sflag [#allocation4], 1
    %522 = vsyncpa %s521, 1
    %523 = vsyncpa [#allocation9], 1
    %s524 = scalar_lea.sflag [#allocation9], 1
    %525 = vsyncpa %s524, 1

</llo_original>
